<compile_context>
chip_gen: v6e
topology: v6e:2x2x1
jax: 0.10.0
libtpu: 0.0.40
codegen_flags: <defaults>
</compile_context>

<pallas_src>
import jax
import jax.numpy as jnp
from jax.experimental import pallas as pl
from jax.experimental.pallas import tpu as pltpu

LANE = 128
SUBLANE = 8


def _round_up(n, m):
    return ((n + m - 1) // m) * m


def _state_net_kernel(x_ref,
                      w1_ref, b1_ref,
                      w2_ref, b2_ref,
                      w3_ref, b3_ref,
                      w4_ref, b4_ref,
                      o_ref):
    # fc1 + relu   (bf16 MXU operands, f32 accumulation / bias / ReLU)
    h = jnp.dot(x_ref[...], w1_ref[...], preferred_element_type=jnp.float32)
    h = jnp.maximum(h + b1_ref[...], 0.0)
    # fc2 + relu (+ dropout2 == identity in eval mode)
    h = jnp.dot(h.astype(w2_ref.dtype), w2_ref[...], preferred_element_type=jnp.float32)
    h = jnp.maximum(h + b2_ref[...], 0.0)
    # fc3 + relu (+ dropout3 == identity in eval mode)
    h = jnp.dot(h.astype(w3_ref.dtype), w3_ref[...], preferred_element_type=jnp.float32)
    h = jnp.maximum(h + b3_ref[...], 0.0)
    # fc4  (lane-dense 128-wide padded output; wrapper slices back to `field`)
    out = jnp.dot(h.astype(w4_ref.dtype), w4_ref[...], preferred_element_type=jnp.float32)
    o_ref[...] = (out + b4_ref[...]).astype(o_ref.dtype)


def init_state_net_params(key, field, actions):
    """Deterministic init mirroring nn.Linear shapes.
    Weights returned transposed: [in_features, out_features]; biases as [1, out]."""
    top = field + actions
    c12 = int(top * 1.33)
    c23 = int(top * 1.67)
    c34 = int(top * 1.33)
    dims = [(top, c12), (c12, c23), (c23, c34), (c34, field)]
    names = ["fc1", "fc2", "fc3", "fc4"]
    params = {}
    for name, (fan_in, fan_out) in zip(names, dims):
        key, kw, kb = jax.random.split(key, 3)
        bound = 1.0 / (fan_in ** 0.5)  # PyTorch default Linear init range
        w = jax.random.uniform(kw, (fan_in, fan_out), jnp.float32, -bound, bound)
        b = jax.random.uniform(kb, (1, fan_out), jnp.float32, -bound, bound)
        params[name] = (w, b)
    return params


def _pad2d(a, rows, cols):
    r, c = a.shape
    return jnp.pad(a, ((0, rows - r), (0, cols - c)))


def prepare_params(params):
    """Zero-pad every dim (input, hidden, output) up to a lane multiple (128)
    and cast weights to bf16.  Biases stay float32 (added to the f32
    accumulator).  Zero pad columns + zero bias + ReLU(0)=0 leave the math
    identical; the wrapper slices the padded output back to `field` columns."""
    w1, b1 = params["fc1"]
    w2, b2 = params["fc2"]
    w3, b3 = params["fc3"]
    w4, b4 = params["fc4"]
    in_dim, out_dim = w1.shape[0], w4.shape[1]
    in_p = _round_up(in_dim, LANE)
    h1 = _round_up(w1.shape[1], LANE)
    h2 = _round_up(w2.shape[1], LANE)
    h3 = _round_up(w3.shape[1], LANE)
    out_p = _round_up(out_dim, LANE)
    return {
        "in_dim": in_dim, "out_dim": out_dim,
        "fc1": (_pad2d(w1, in_p, h1).astype(jnp.bfloat16), _pad2d(b1, 1, h1)),
        "fc2": (_pad2d(w2, h1, h2).astype(jnp.bfloat16), _pad2d(b2, 1, h2)),
        "fc3": (_pad2d(w3, h2, h3).astype(jnp.bfloat16), _pad2d(b3, 1, h3)),
        "fc4": (_pad2d(w4, h3, out_p).astype(jnp.bfloat16), _pad2d(b4, 1, out_p)),
    }


def state_net_forward(x, prep, *, tb=None, max_tb=2048, vmem_limit_bytes=None):
    """x: [batch, field + actions] float32.  prep: output of prepare_params()."""
    w1, b1 = prep["fc1"]
    w2, b2 = prep["fc2"]
    w3, b3 = prep["fc3"]
    w4, b4 = prep["fc4"]

    batch, in_dim = x.shape
    assert in_dim == prep["in_dim"], (in_dim, prep["in_dim"])
    in_pad = w1.shape[0]      # lane-padded input width (multiple of 128)
    out_pad = w4.shape[1]     # lane-padded output width (multiple of 128)
    out_dim = prep["out_dim"]

    batch8 = _round_up(batch, SUBLANE)
    if tb is None:
        # One big tile per TensorCore: 2 grid steps so v7x's second TC gets
        # work (no-op on single-TC v5e/v6e); capped at max_tb rows.  Even at
        # 2048 rows total residency is ~2 MiB, far under every VMEM budget.
        tb = min(max_tb, _round_up(pl.cdiv(batch8, 2), SUBLANE))
    tb = max(SUBLANE, min(_round_up(tb, SUBLANE), batch8))
    n_tiles = pl.cdiv(batch8, tb)
    padded_batch = n_tiles * tb

    xb = x.astype(jnp.bfloat16)
    if padded_batch != batch or in_pad != in_dim:
        xb = jnp.pad(xb, ((0, padded_batch - batch), (0, in_pad - in_dim)))

    # Weights / biases: constant index_map -> VMEM-resident across all grid steps.
    resident = lambda a: pl.BlockSpec(a.shape, lambda i: (0,) * a.ndim)

    flops = 2 * padded_batch * (in_pad * w1.shape[1]
                                + w2.shape[0] * w2.shape[1]
                                + w3.shape[0] * w3.shape[1]
                                + w4.shape[0] * out_pad)
    bytes_accessed = (int(xb.size) * xb.dtype.itemsize
                      + sum(int(a.size) * a.dtype.itemsize
                            for a in (w1, b1, w2, b2, w3, b3, w4, b4))
                      + padded_batch * out_pad * 4)

    out = pl.pallas_call(
        _state_net_kernel,
        out_shape=jax.ShapeDtypeStruct((padded_batch, out_pad), jnp.float32),
        grid_spec=pltpu.PrefetchScalarGridSpec(
            num_scalar_prefetch=0,
            grid=(n_tiles,),
            in_specs=[pl.BlockSpec((tb, in_pad), lambda i: (i, 0)),
                      resident(w1), resident(b1),
                      resident(w2), resident(b2),
                      resident(w3), resident(b3),
                      resident(w4), resident(b4)],
            out_specs=pl.BlockSpec((tb, out_pad), lambda i: (i, 0))),
        compiler_params=pltpu.CompilerParams(
            dimension_semantics=("parallel",),   # v7x: batch tiles across both TCs
            vmem_limit_bytes=vmem_limit_bytes),
        cost_estimate=pl.CostEstimate(flops=flops, transcendentals=0,
                                      bytes_accessed=bytes_accessed),
    )(xb, w1, b1, w2, b2, w3, b3, w4, b4)

    # Slice away the batch padding and the lane-padding of the 16-wide output.
    return out[:batch, :out_dim]


def state_net_reference(x, params):
    """Pure-JAX reference with the same mixed precision as the kernel:
    bf16 matmul operands, f32 accumulation / bias / ReLU, eval-mode dropout."""
    h = x.astype(jnp.bfloat16)
    for name in ["fc1", "fc2", "fc3"]:
        w, b = params[name]
        h = jnp.dot(h, w.astype(jnp.bfloat16), preferred_element_type=jnp.float32)
        h = jnp.maximum(h + b, 0.0).astype(jnp.bfloat16)
    w, b = params["fc4"]
    return jnp.dot(h, w.astype(jnp.bfloat16), preferred_element_type=jnp.float32) + b


if __name__ == "__main__":
    field, actions = 16, 8        # topFeatures = 24 -> 31 -> 40 -> 31 -> 16
    batch = 64                    # small demo batch -> 2 grid steps of 32 rows

    key = jax.random.PRNGKey(0)
    key, kx = jax.random.split(key)
    x = jax.random.normal(kx, (batch, field + actions), dtype=jnp.float32)

    params = init_state_net_params(key, field, actions)   # logical f32 params
    prep = prepare_params(params)                          # lane-padded bf16 device params

    out = state_net_forward(x, prep)
    out = jax.block_until_ready(out)

    ref = state_net_reference(x, params)
    assert out.shape == (batch, field), out.shape
    assert jnp.allclose(out, ref, atol=1e-3, rtol=1e-3), "mismatch vs reference"

    print("KERNEL_OK")
</pallas_src>

<mosaic_0001>
module attributes {stable_mosaic.version = 11 : i64} {
  func.func @_state_net_kernel(%arg0: i32, %arg1: memref<32x128xbf16, #tpu.memory_space<vmem>>, %arg2: memref<128x128xbf16, #tpu.memory_space<vmem>>, %arg3: memref<1x128xf32, #tpu.memory_space<vmem>>, %arg4: memref<128x128xbf16, #tpu.memory_space<vmem>>, %arg5: memref<1x128xf32, #tpu.memory_space<vmem>>, %arg6: memref<128x128xbf16, #tpu.memory_space<vmem>>, %arg7: memref<1x128xf32, #tpu.memory_space<vmem>>, %arg8: memref<128x128xbf16, #tpu.memory_space<vmem>>, %arg9: memref<1x128xf32, #tpu.memory_space<vmem>>, %arg10: memref<32x128xf32, #tpu.memory_space<vmem>>) attributes {dimension_semantics = [#tpu.dimension_semantics<parallel>], iteration_bounds = array<i64: 2>, scalar_prefetch = 0 : i64, scratch_operands = 0 : i64, tpu.core_type = #tpu.core_type<tc>, window_params = [{transform_indices = @transform_0, window_bounds = array<i64: 32, 128>}, {pipeline_mode = #tpu.pipeline_mode<synchronous>, transform_indices = @transform_1, window_bounds = array<i64: 128, 128>}, {pipeline_mode = #tpu.pipeline_mode<synchronous>, transform_indices = @transform_2, window_bounds = array<i64: 1, 128>}, {pipeline_mode = #tpu.pipeline_mode<synchronous>, transform_indices = @transform_3, window_bounds = array<i64: 128, 128>}, {pipeline_mode = #tpu.pipeline_mode<synchronous>, transform_indices = @transform_4, window_bounds = array<i64: 1, 128>}, {pipeline_mode = #tpu.pipeline_mode<synchronous>, transform_indices = @transform_5, window_bounds = array<i64: 128, 128>}, {pipeline_mode = #tpu.pipeline_mode<synchronous>, transform_indices = @transform_6, window_bounds = array<i64: 1, 128>}, {pipeline_mode = #tpu.pipeline_mode<synchronous>, transform_indices = @transform_7, window_bounds = array<i64: 128, 128>}, {pipeline_mode = #tpu.pipeline_mode<synchronous>, transform_indices = @transform_8, window_bounds = array<i64: 1, 128>}, {transform_indices = @transform_9, window_bounds = array<i64: 32, 128>}]} {
    %c0 = arith.constant 0 : index
    %c0_0 = arith.constant 0 : index
    %0 = vector.load %arg1[%c0, %c0_0] : memref<32x128xbf16, #tpu.memory_space<vmem>>, vector<32x128xbf16>
    %c0_1 = arith.constant 0 : index
    %c0_2 = arith.constant 0 : index
    %1 = vector.load %arg2[%c0_1, %c0_2] : memref<128x128xbf16, #tpu.memory_space<vmem>>, vector<128x128xbf16>
    %cst = arith.constant dense<0.000000e+00> : vector<32x128xf32>
    %2 = tpu.matmul %0, %1, %cst {dimension_numbers = #tpu.dot_dimension_numbers<[1], [0], [0], [1], [0, 0, 1, 1], [], []>} : vector<32x128xbf16>, vector<128x128xbf16>, vector<32x128xf32> -> vector<32x128xf32>
    %c0_3 = arith.constant 0 : index
    %c0_4 = arith.constant 0 : index
    %3 = vector.load %arg3[%c0_3, %c0_4] : memref<1x128xf32, #tpu.memory_space<vmem>>, vector<1x128xf32>
    %4 = vector.broadcast %3 : vector<1x128xf32> to vector<32x128xf32>
    %5 = arith.addf %2, %4 : vector<32x128xf32>
    %cst_5 = arith.constant 0.000000e+00 : f32
    %6 = vector.broadcast %cst_5 : f32 to vector<32x128xf32>
    %7 = arith.maximumf %5, %6 : vector<32x128xf32>
    %8 = arith.truncf %7 : vector<32x128xf32> to vector<32x128xbf16>
    %c0_6 = arith.constant 0 : index
    %c0_7 = arith.constant 0 : index
    %9 = vector.load %arg4[%c0_6, %c0_7] : memref<128x128xbf16, #tpu.memory_space<vmem>>, vector<128x128xbf16>
    %cst_8 = arith.constant dense<0.000000e+00> : vector<32x128xf32>
    %10 = tpu.matmul %8, %9, %cst_8 {dimension_numbers = #tpu.dot_dimension_numbers<[1], [0], [0], [1], [0, 0, 1, 1], [], []>} : vector<32x128xbf16>, vector<128x128xbf16>, vector<32x128xf32> -> vector<32x128xf32>
    %c0_9 = arith.constant 0 : index
    %c0_10 = arith.constant 0 : index
    %11 = vector.load %arg5[%c0_9, %c0_10] : memref<1x128xf32, #tpu.memory_space<vmem>>, vector<1x128xf32>
    %12 = vector.broadcast %11 : vector<1x128xf32> to vector<32x128xf32>
    %13 = arith.addf %10, %12 : vector<32x128xf32>
    %cst_11 = arith.constant 0.000000e+00 : f32
    %14 = vector.broadcast %cst_11 : f32 to vector<32x128xf32>
    %15 = arith.maximumf %13, %14 : vector<32x128xf32>
    %16 = arith.truncf %15 : vector<32x128xf32> to vector<32x128xbf16>
    %c0_12 = arith.constant 0 : index
    %c0_13 = arith.constant 0 : index
    %17 = vector.load %arg6[%c0_12, %c0_13] : memref<128x128xbf16, #tpu.memory_space<vmem>>, vector<128x128xbf16>
    %cst_14 = arith.constant dense<0.000000e+00> : vector<32x128xf32>
    %18 = tpu.matmul %16, %17, %cst_14 {dimension_numbers = #tpu.dot_dimension_numbers<[1], [0], [0], [1], [0, 0, 1, 1], [], []>} : vector<32x128xbf16>, vector<128x128xbf16>, vector<32x128xf32> -> vector<32x128xf32>
    %c0_15 = arith.constant 0 : index
    %c0_16 = arith.constant 0 : index
    %19 = vector.load %arg7[%c0_15, %c0_16] : memref<1x128xf32, #tpu.memory_space<vmem>>, vector<1x128xf32>
    %20 = vector.broadcast %19 : vector<1x128xf32> to vector<32x128xf32>
    %21 = arith.addf %18, %20 : vector<32x128xf32>
    %cst_17 = arith.constant 0.000000e+00 : f32
    %22 = vector.broadcast %cst_17 : f32 to vector<32x128xf32>
    %23 = arith.maximumf %21, %22 : vector<32x128xf32>
    %24 = arith.truncf %23 : vector<32x128xf32> to vector<32x128xbf16>
    %c0_18 = arith.constant 0 : index
    %c0_19 = arith.constant 0 : index
    %25 = vector.load %arg8[%c0_18, %c0_19] : memref<128x128xbf16, #tpu.memory_space<vmem>>, vector<128x128xbf16>
    %cst_20 = arith.constant dense<0.000000e+00> : vector<32x128xf32>
    %26 = tpu.matmul %24, %25, %cst_20 {dimension_numbers = #tpu.dot_dimension_numbers<[1], [0], [0], [1], [0, 0, 1, 1], [], []>} : vector<32x128xbf16>, vector<128x128xbf16>, vector<32x128xf32> -> vector<32x128xf32>
    %c0_21 = arith.constant 0 : index
    %c0_22 = arith.constant 0 : index
    %27 = vector.load %arg9[%c0_21, %c0_22] : memref<1x128xf32, #tpu.memory_space<vmem>>, vector<1x128xf32>
    %28 = vector.broadcast %27 : vector<1x128xf32> to vector<32x128xf32>
    %29 = arith.addf %26, %28 : vector<32x128xf32>
    %c0_23 = arith.constant 0 : index
    %c0_24 = arith.constant 0 : index
    %30 = vector.load %arg10[%c0_23, %c0_24] : memref<32x128xf32, #tpu.memory_space<vmem>>, vector<32x128xf32>
    tpu.vector_store %arg10[%c0_23, %c0_24], %29 {strides = array<i32>} : memref<32x128xf32, #tpu.memory_space<vmem>>, vector<32x128xf32>,
    return
  }
  func.func @transform_0(%arg0: i32) -> (i32, i32) {
    %c0_i32 = arith.constant 0 : i32
    %c0_i32_0 = arith.constant 0 : i32
    return %arg0, %c0_i32 : i32, i32
  }
  func.func @transform_1(%arg0: i32) -> (i32, i32) {
    %c0_i32 = arith.constant 0 : i32
    %c0_i32_0 = arith.constant 0 : i32
    %c0_i32_1 = arith.constant 0 : i32
    return %c0_i32, %c0_i32_0 : i32, i32
  }
  func.func @transform_2(%arg0: i32) -> (i32, i32) {
    %c0_i32 = arith.constant 0 : i32
    %c0_i32_0 = arith.constant 0 : i32
    %c0_i32_1 = arith.constant 0 : i32
    return %c0_i32, %c0_i32_0 : i32, i32
  }
  func.func @transform_3(%arg0: i32) -> (i32, i32) {
    %c0_i32 = arith.constant 0 : i32
    %c0_i32_0 = arith.constant 0 : i32
    %c0_i32_1 = arith.constant 0 : i32
    return %c0_i32, %c0_i32_0 : i32, i32
  }
  func.func @transform_4(%arg0: i32) -> (i32, i32) {
    %c0_i32 = arith.constant 0 : i32
    %c0_i32_0 = arith.constant 0 : i32
    %c0_i32_1 = arith.constant 0 : i32
    return %c0_i32, %c0_i32_0 : i32, i32
  }
  func.func @transform_5(%arg0: i32) -> (i32, i32) {
    %c0_i32 = arith.constant 0 : i32
    %c0_i32_0 = arith.constant 0 : i32
    %c0_i32_1 = arith.constant 0 : i32
    return %c0_i32, %c0_i32_0 : i32, i32
  }
  func.func @transform_6(%arg0: i32) -> (i32, i32) {
    %c0_i32 = arith.constant 0 : i32
    %c0_i32_0 = arith.constant 0 : i32
    %c0_i32_1 = arith.constant 0 : i32
    return %c0_i32, %c0_i32_0 : i32, i32
  }
  func.func @transform_7(%arg0: i32) -> (i32, i32) {
    %c0_i32 = arith.constant 0 : i32
    %c0_i32_0 = arith.constant 0 : i32
    %c0_i32_1 = arith.constant 0 : i32
    return %c0_i32, %c0_i32_0 : i32, i32
  }
  func.func @transform_8(%arg0: i32) -> (i32, i32) {
    %c0_i32 = arith.constant 0 : i32
    %c0_i32_0 = arith.constant 0 : i32
    %c0_i32_1 = arith.constant 0 : i32
    return %c0_i32, %c0_i32_0 : i32, i32
  }
  func.func @transform_9(%arg0: i32) -> (i32, i32) {
    %c0_i32 = arith.constant 0 : i32
    %c0_i32_0 = arith.constant 0 : i32
    return %arg0, %c0_i32 : i32, i32
  }
}

</mosaic_0001>

<llo_original>
// kernel: tpu_custom_call.1
$region0: #{tpu_custom_call.1}
  #allocation0 [shape = 'u32[]', space=smem, size = 0x4, offset = 0x4, fixed_abs, tag = 'smem constant byte address 0x4 - core index']
  #allocation1 [shape = 'u32[144,128]{1,0:T(1,128)}', space=vmem, size = 0x12000, scoped, tag = 'internal scratch']
  %s0 = inlined_call_operand.hbm [shape: bf16[64,128], index: 0, kind: input, shape index: {}]
  %s1 = inlined_call_operand.hbm [shape: bf16[128,128], index: 1, kind: input, shape index: {}]
  %s2 = inlined_call_operand.vmem [shape: f32[1,128], index: 2, kind: input, shape index: {}]
  %s3 = inlined_call_operand.hbm [shape: bf16[128,128], index: 3, kind: input, shape index: {}]
  %s4 = inlined_call_operand.vmem [shape: f32[1,128], index: 4, kind: input, shape index: {}]
  %s5 = inlined_call_operand.hbm [shape: bf16[128,128], index: 5, kind: input, shape index: {}]
  %s6 = inlined_call_operand.vmem [shape: f32[1,128], index: 6, kind: input, shape index: {}]
  %s7 = inlined_call_operand.hbm [shape: bf16[128,128], index: 7, kind: input, shape index: {}]
  %s8 = inlined_call_operand.vmem [shape: f32[1,128], index: 8, kind: input, shape index: {}]
  %s9 = inlined_call_operand.hbm [shape: f32[64,128], index: 9, kind: output, shape index: {}]
  %s10 = sld [smem:[#allocation0]]
  $region89: #{tpu_custom_call.1} parent=0
    _
  %s12 = ssub.s32 1, %s10
  %s13 = scalar_select 0, %s12, %s10
  $region1: #{tpu_custom_call.1} parent=0
    #allocation2 [shape = 'u8[16384]{0}', space=vmem, size = 0x4000, scoped, tag = 'input window, operand 0']
    #allocation3 [shape = 's32[2]{0}', space=sflag, size = 0x8, scoped, tag = 'scoped memory for tpu_custom_call.1']
    #allocation4 [shape = 's32[2]{0}', space=sflag, size = 0x8, scoped, tag = 'scoped memory for tpu_custom_call.1']
    #allocation5 [shape = 'u8[32768]{0}', space=vmem, size = 0x8000, scoped, tag = 'input window, operand 1, single buffered']
    #allocation6 [shape = 's32[1]{0}', space=sflag, size = 0x4, scoped, tag = 'scoped memory for tpu_custom_call.1']
    #allocation7 [shape = 'u8[32768]{0}', space=vmem, size = 0x8000, scoped, tag = 'input window, operand 3, single buffered']
    #allocation8 [shape = 'u8[32768]{0}', space=vmem, size = 0x8000, scoped, tag = 'input window, operand 5, single buffered']
    #allocation9 [shape = 's32[1]{0}', space=sflag, size = 0x4, scoped, tag = 'scoped memory for tpu_custom_call.1']
    #allocation10 [shape = 'u8[32768]{0}', space=vmem, size = 0x8000, scoped, tag = 'input window, operand 7, single buffered']
    #allocation11 [shape = 'u8[32768]{0}', space=vmem, size = 0x8000, scoped, tag = 'output window, operand 0']
    %14 = vsyncpa [#allocation3], 0
    %s15 = scalar_lea.sflag [#allocation3], 1
    %16 = vsyncpa %s15, 0
    %17 = vsyncpa [#allocation6], 0
    %18 = vsyncpa [#allocation9], 0
    %19 = vsyncpa [#allocation4], 0
    %s20 = scalar_lea.sflag [#allocation4], 1
    %21 = vsyncpa %s20, 0
    loop: start=0, step=1, limit=4
    $region2: #{tpu_custom_call.1} parent=1 // loop_pre_header
      _
    $region3: #{tpu_custom_call.1} parent=1 // loop_header
      %s23 = sphi 0, %s27
      %p24 = scmp.ge.s32.totalorder %s23, 4
      %s33 = sphi 0, %s35
      %s36 = sphi 0, %s33
      %s37 = sphi 0, %s36
      %s53 = sphi 0, %s37
      %s57 = sphi 0, %s57
      %s59 = sphi 0, %s57
      %s60 = sphi 0, %s59
      %s74 = sphi 0, %s60
      %s78 = sphi 0, %s78
      %s80 = sphi 0, %s78
      %s81 = sphi 0, %s80
      %s95 = sphi 0, %s81
      %s99 = sphi 0, %s99
      %s101 = sphi 0, %s99
      %s102 = sphi 0, %s101
      %s116 = sphi 0, %s102
      %s120 = sphi 0, %s120
      %s122 = sphi 0, %s120
      %s123 = sphi 0, %s122
      %s137 = sphi 0, %s123
      %s141 = sphi 0, %s141
      %s143 = sphi 0, %s141
      %s144 = sphi 0, %s143
      %s158 = sphi 0, %s144
      %s162 = sphi 0, %s162
      %s164 = sphi 0, %s162
      %s165 = sphi 0, %s164
      %s179 = sphi 0, %s165
      %s183 = sphi 0, %s183
      %s185 = sphi 0, %s183
      %s186 = sphi 0, %s185
      %s200 = sphi 0, %s186
      %s204 = sphi 0, %s204
      %s206 = sphi 0, %s204
      %s207 = sphi 0, %s206
      %s221 = sphi 0, %s207
      %s227 = sphi 0, %s229
      %s230 = sphi 0, %s227
      %s231 = sphi 0, %s230
      %s247 = sphi 0, %s231
    $region4: #{tpu_custom_call.1} parent=1 // loop_header_branch
      %26 = sbr.rel (%p24) target = $region8
    $region5: #{tpu_custom_call.1} parent=1 // loop_body
      %s28 = ssub.s32 %s23, 1
      %s29 = ssub.s32 %s23, 2
      %s30 = sadd.s32 %s23, 1
      %s31 = ssub.s32 %s23, %s30
      %p32 = scmp.eq.s32.totalorder %s31, 0
      %s34 = sadd.s32 %s33, 1
      %s35 = scalar_select %p32, %s33, %s34
      %p38 = pneg %p32
      %p39 = scmp.eq.s32.totalorder %s23, 1
      %p40 = por %p38, %p39
      %p41 = scmp.ne.s32.totalorder %s33, %s36
      %p42 = scmp.eq.s32.totalorder %s23, 0
      %p43 = por %p41, %p42
      %p44 = scmp.ne.s32.totalorder %s33, %s36
      %p45 = scmp.eq.s32.totalorder %s28, 1
      %p46 = por %p44, %p45
      %p47 = scmp.ne.s32.totalorder %s36, %s37
      %p48 = scmp.eq.s32.totalorder %s28, 0
      %p49 = por %p47, %p48
      %p50 = scmp.ne.s32.totalorder %s36, %s37
      %p51 = scmp.eq.s32.totalorder %s29, 1
      %p52 = por %p50, %p51
      %p54 = scmp.ne.s32.totalorder %s37, %s53
      %p55 = scmp.eq.s32.totalorder %s29, 0
      %p56 = por %p54, %p55
      %s58 = sadd.s32 %s57, 1
      %p61 = scmp.eq.s32.totalorder %s23, 1
      %p62 = scmp.ne.s32.totalorder %s57, %s59
      %p63 = scmp.eq.s32.totalorder %s23, 0
      %p64 = por %p62, %p63
      %p65 = scmp.ne.s32.totalorder %s57, %s59
      %p66 = scmp.eq.s32.totalorder %s28, 1
      %p67 = por %p65, %p66
      %p68 = scmp.ne.s32.totalorder %s59, %s60
      %p69 = scmp.eq.s32.totalorder %s28, 0
      %p70 = por %p68, %p69
      %p71 = scmp.ne.s32.totalorder %s59, %s60
      %p72 = scmp.eq.s32.totalorder %s29, 1
      %p73 = por %p71, %p72
      %p75 = scmp.ne.s32.totalorder %s60, %s74
      %p76 = scmp.eq.s32.totalorder %s29, 0
      %p77 = por %p75, %p76
      %s79 = sadd.s32 %s78, 1
      %p82 = scmp.eq.s32.totalorder %s23, 1
      %p83 = scmp.ne.s32.totalorder %s78, %s80
      %p84 = scmp.eq.s32.totalorder %s23, 0
      %p85 = por %p83, %p84
      %p86 = scmp.ne.s32.totalorder %s78, %s80
      %p87 = scmp.eq.s32.totalorder %s28, 1
      %p88 = por %p86, %p87
      %p89 = scmp.ne.s32.totalorder %s80, %s81
      %p90 = scmp.eq.s32.totalorder %s28, 0
      %p91 = por %p89, %p90
      %p92 = scmp.ne.s32.totalorder %s80, %s81
      %p93 = scmp.eq.s32.totalorder %s29, 1
      %p94 = por %p92, %p93
      %p96 = scmp.ne.s32.totalorder %s81, %s95
      %p97 = scmp.eq.s32.totalorder %s29, 0
      %p98 = por %p96, %p97
      %s100 = sadd.s32 %s99, 1
      %p103 = scmp.eq.s32.totalorder %s23, 1
      %p104 = scmp.ne.s32.totalorder %s99, %s101
      %p105 = scmp.eq.s32.totalorder %s23, 0
      %p106 = por %p104, %p105
      %p107 = scmp.ne.s32.totalorder %s99, %s101
      %p108 = scmp.eq.s32.totalorder %s28, 1
      %p109 = por %p107, %p108
      %p110 = scmp.ne.s32.totalorder %s101, %s102
      %p111 = scmp.eq.s32.totalorder %s28, 0
      %p112 = por %p110, %p111
      %p113 = scmp.ne.s32.totalorder %s101, %s102
      %p114 = scmp.eq.s32.totalorder %s29, 1
      %p115 = por %p113, %p114
      %p117 = scmp.ne.s32.totalorder %s102, %s116
      %p118 = scmp.eq.s32.totalorder %s29, 0
      %p119 = por %p117, %p118
      %s121 = sadd.s32 %s120, 1
      %p124 = scmp.eq.s32.totalorder %s23, 1
      %p125 = scmp.ne.s32.totalorder %s120, %s122
      %p126 = scmp.eq.s32.totalorder %s23, 0
      %p127 = por %p125, %p126
      %p128 = scmp.ne.s32.totalorder %s120, %s122
      %p129 = scmp.eq.s32.totalorder %s28, 1
      %p130 = por %p128, %p129
      %p131 = scmp.ne.s32.totalorder %s122, %s123
      %p132 = scmp.eq.s32.totalorder %s28, 0
      %p133 = por %p131, %p132
      %p134 = scmp.ne.s32.totalorder %s122, %s123
      %p135 = scmp.eq.s32.totalorder %s29, 1
      %p136 = por %p134, %p135
      %p138 = scmp.ne.s32.totalorder %s123, %s137
      %p139 = scmp.eq.s32.totalorder %s29, 0
      %p140 = por %p138, %p139
      %s142 = sadd.s32 %s141, 1
      %p145 = scmp.eq.s32.totalorder %s23, 1
      %p146 = scmp.ne.s32.totalorder %s141, %s143
      %p147 = scmp.eq.s32.totalorder %s23, 0
      %p148 = por %p146, %p147
      %p149 = scmp.ne.s32.totalorder %s141, %s143
      %p150 = scmp.eq.s32.totalorder %s28, 1
      %p151 = por %p149, %p150
      %p152 = scmp.ne.s32.totalorder %s143, %s144
      %p153 = scmp.eq.s32.totalorder %s28, 0
      %p154 = por %p152, %p153
      %p155 = scmp.ne.s32.totalorder %s143, %s144
      %p156 = scmp.eq.s32.totalorder %s29, 1
      %p157 = por %p155, %p156
      %p159 = scmp.ne.s32.totalorder %s144, %s158
      %p160 = scmp.eq.s32.totalorder %s29, 0
      %p161 = por %p159, %p160
      %s163 = sadd.s32 %s162, 1
      %p166 = scmp.eq.s32.totalorder %s23, 1
      %p167 = scmp.ne.s32.totalorder %s162, %s164
      %p168 = scmp.eq.s32.totalorder %s23, 0
      %p169 = por %p167, %p168
      %p170 = scmp.ne.s32.totalorder %s162, %s164
      %p171 = scmp.eq.s32.totalorder %s28, 1
      %p172 = por %p170, %p171
      %p173 = scmp.ne.s32.totalorder %s164, %s165
      %p174 = scmp.eq.s32.totalorder %s28, 0
      %p175 = por %p173, %p174
      %p176 = scmp.ne.s32.totalorder %s164, %s165
      %p177 = scmp.eq.s32.totalorder %s29, 1
      %p178 = por %p176, %p177
      %p180 = scmp.ne.s32.totalorder %s165, %s179
      %p181 = scmp.eq.s32.totalorder %s29, 0
      %p182 = por %p180, %p181
      %s184 = sadd.s32 %s183, 1
      %p187 = scmp.eq.s32.totalorder %s23, 1
      %p188 = scmp.ne.s32.totalorder %s183, %s185
      %p189 = scmp.eq.s32.totalorder %s23, 0
      %p190 = por %p188, %p189
      %p191 = scmp.ne.s32.totalorder %s183, %s185
      %p192 = scmp.eq.s32.totalorder %s28, 1
      %p193 = por %p191, %p192
      %p194 = scmp.ne.s32.totalorder %s185, %s186
      %p195 = scmp.eq.s32.totalorder %s28, 0
      %p196 = por %p194, %p195
      %p197 = scmp.ne.s32.totalorder %s185, %s186
      %p198 = scmp.eq.s32.totalorder %s29, 1
      %p199 = por %p197, %p198
      %p201 = scmp.ne.s32.totalorder %s186, %s200
      %p202 = scmp.eq.s32.totalorder %s29, 0
      %p203 = por %p201, %p202
      %s205 = sadd.s32 %s204, 1
      %p208 = scmp.eq.s32.totalorder %s23, 1
      %p209 = scmp.ne.s32.totalorder %s204, %s206
      %p210 = scmp.eq.s32.totalorder %s23, 0
      %p211 = por %p209, %p210
      %p212 = scmp.ne.s32.totalorder %s204, %s206
      %p213 = scmp.eq.s32.totalorder %s28, 1
      %p214 = por %p212, %p213
      %p215 = scmp.ne.s32.totalorder %s206, %s207
      %p216 = scmp.eq.s32.totalorder %s28, 0
      %p217 = por %p215, %p216
      %p218 = scmp.ne.s32.totalorder %s206, %s207
      %p219 = scmp.eq.s32.totalorder %s29, 1
      %p220 = por %p218, %p219
      %p222 = scmp.ne.s32.totalorder %s207, %s221
      %p223 = scmp.eq.s32.totalorder %s29, 0
      %p224 = por %p222, %p223
      %s225 = ssub.s32 %s23, %s30
      %p226 = scmp.eq.s32.totalorder %s225, 0
      %s228 = sadd.s32 %s227, 1
      %s229 = scalar_select %p226, %s227, %s228
      %p232 = pneg %p226
      %p233 = scmp.eq.s32.totalorder %s23, 1
      %p234 = por %p232, %p233
      %p235 = scmp.ne.s32.totalorder %s227, %s230
      %p236 = scmp.eq.s32.totalorder %s23, 0
      %p237 = por %p235, %p236
      %p238 = scmp.ne.s32.totalorder %s227, %s230
      %p239 = scmp.eq.s32.totalorder %s28, 1
      %p240 = por %p238, %p239
      %p241 = scmp.ne.s32.totalorder %s230, %s231
      %p242 = scmp.eq.s32.totalorder %s28, 0
      %p243 = por %p241, %p242
      %p244 = scmp.ne.s32.totalorder %s230, %s231
      %p245 = scmp.eq.s32.totalorder %s29, 1
      %p246 = por %p244, %p245
      %p248 = scmp.ne.s32.totalorder %s231, %s247
      %p249 = scmp.eq.s32.totalorder %s29, 0
      %p250 = por %p248, %p249
      %p251 = scmp.le.s32.totalorder 1, %s23
      %p252 = scmp.lt.s32.totalorder %s23, 3
      %p253 = pnand %p251, %p252
      %p254 = pneg %p253
      // Predicated region
      $region9: #{tpu_custom_call.1} parent=5 // pred_check
        _
      $region10: #{tpu_custom_call.1} parent=5 // pred_check_branch
        %256 = sbr.rel (%p253) target = $region12
      $region11: #{tpu_custom_call.1} parent=5 // pred_region
        %s257 = ssub.s32 %s23, 1
        // Predicated region
        $region13: #{tpu_custom_call.1} parent=11 // pred_check
          %p258 = pneg %p70
        $region14: #{tpu_custom_call.1} parent=11 // pred_check_branch
          %260 = sbr.rel (%p258) target = $region16
        $region15: #{tpu_custom_call.1} parent=11 // pred_region
          %s262 = ssub.s32 1024, 1024
          %263 = vsyncadd [#allocation6], %s262
          %s264 = sshll.u32 [#allocation5], 4
          %s265 = int_to_ptr.vmem [resolvable:$true] %s264
          %270 = dma.hbm_to_vmem [thread:$0]  %s1, 1024, %s265, [#allocation6], 64, 64, 4
        $region16: #{tpu_custom_call.1} parent=11 // pred_fallthru
          _
        // Predicated region
        $region17: #{tpu_custom_call.1} parent=11 // pred_check
          %p271 = pneg %p91
        $region18: #{tpu_custom_call.1} parent=11 // pred_check_branch
          %273 = sbr.rel (%p271) target = $region20
        $region19: #{tpu_custom_call.1} parent=11 // pred_region
          _
        $region20: #{tpu_custom_call.1} parent=11 // pred_fallthru
          _
        // Predicated region
        $region21: #{tpu_custom_call.1} parent=11 // pred_check
          %p274 = pneg %p112
        $region22: #{tpu_custom_call.1} parent=11 // pred_check_branch
          %276 = sbr.rel (%p274) target = $region24
        $region23: #{tpu_custom_call.1} parent=11 // pred_region
          %s278 = ssub.s32 1024, 1024
          %279 = vsyncadd [#allocation6], %s278
          %s280 = sshll.u32 [#allocation7], 4
          %s281 = int_to_ptr.vmem [resolvable:$true] %s280
          %286 = dma.hbm_to_vmem [thread:$0]  %s3, 1024, %s281, [#allocation6], 64, 64, 4
        $region24: #{tpu_custom_call.1} parent=11 // pred_fallthru
          _
        // Predicated region
        $region25: #{tpu_custom_call.1} parent=11 // pred_check
          %p287 = pneg %p133
        $region26: #{tpu_custom_call.1} parent=11 // pred_check_branch
          %289 = sbr.rel (%p287) target = $region28
        $region27: #{tpu_custom_call.1} parent=11 // pred_region
          _
        $region28: #{tpu_custom_call.1} parent=11 // pred_fallthru
          _
        // Predicated region
        $region29: #{tpu_custom_call.1} parent=11 // pred_check
          %p290 = pneg %p154
        $region30: #{tpu_custom_call.1} parent=11 // pred_check_branch
          %292 = sbr.rel (%p290) target = $region32
        $region31: #{tpu_custom_call.1} parent=11 // pred_region
          %s294 = ssub.s32 1024, 1024
          %295 = vsyncadd [#allocation9], %s294
          %s296 = sshll.u32 [#allocation8], 4
          %s297 = int_to_ptr.vmem [resolvable:$true] %s296
          %302 = dma.hbm_to_vmem [thread:$0]  %s5, 1024, %s297, [#allocation9], 64, 64, 4
        $region32: #{tpu_custom_call.1} parent=11 // pred_fallthru
          _
        // Predicated region
        $region33: #{tpu_custom_call.1} parent=11 // pred_check
          %p303 = pneg %p175
        $region34: #{tpu_custom_call.1} parent=11 // pred_check_branch
          %305 = sbr.rel (%p303) target = $region36
        $region35: #{tpu_custom_call.1} parent=11 // pred_region
          _
        $region36: #{tpu_custom_call.1} parent=11 // pred_fallthru
          _
        // Predicated region
        $region37: #{tpu_custom_call.1} parent=11 // pred_check
          %p306 = pneg %p196
        $region38: #{tpu_custom_call.1} parent=11 // pred_check_branch
          %308 = sbr.rel (%p306) target = $region40
        $region39: #{tpu_custom_call.1} parent=11 // pred_region
          %s310 = ssub.s32 1024, 1024
          %311 = vsyncadd [#allocation9], %s310
          %s312 = sshll.u32 [#allocation10], 4
          %s313 = int_to_ptr.vmem [resolvable:$true] %s312
          %318 = dma.hbm_to_vmem [thread:$0]  %s7, 1024, %s313, [#allocation9], 64, 64, 4
        $region40: #{tpu_custom_call.1} parent=11 // pred_fallthru
          _
        // Predicated region
        $region41: #{tpu_custom_call.1} parent=11 // pred_check
          %p319 = pneg %p217
        $region42: #{tpu_custom_call.1} parent=11 // pred_check_branch
          %321 = sbr.rel (%p319) target = $region44
        $region43: #{tpu_custom_call.1} parent=11 // pred_region
          _
        $region44: #{tpu_custom_call.1} parent=11 // pred_fallthru
          _
      $region12: #{tpu_custom_call.1} parent=5 // pred_fallthru
        _
      %p322 = scmp.lt.s32.totalorder %s23, 2
      // Predicated region
      $region45: #{tpu_custom_call.1} parent=5 // pred_check
        %p323 = pneg %p322
      $region46: #{tpu_custom_call.1} parent=5 // pred_check_branch
        %325 = sbr.rel (%p323) target = $region48
      $region47: #{tpu_custom_call.1} parent=5 // pred_region
        // Predicated region
        $region49: #{tpu_custom_call.1} parent=47 // pred_check
          %p326 = pneg %p43
        $region50: #{tpu_custom_call.1} parent=47 // pred_check_branch
          %328 = sbr.rel (%p326) target = $region52
        $region51: #{tpu_custom_call.1} parent=47 // pred_region
          %s329 = sand.u32 %s33, 1
          %s330 = scalar_lea.sflag [#allocation3], %s329
          %s331 = sand.u32 %s33, 1
          %s332 = smul.addr %s331, 16
          %s333 = scalar_lea.vmem [#allocation2], %s332
          %s334 = smul.u32 4, %s23
          %s336 = ssub.s32 256, 256
          %337 = vsyncadd %s330, %s336
          %s338 = smul.addr %s334, 64
          %s339 = scalar_lea.hbm %s0, %s338
          %s340 = sshll.u32 %s333, 4
          %s341 = int_to_ptr.vmem [resolvable:$true] %s340
          %346 = dma.hbm_to_vmem [thread:$0]  %s339, 256, %s341, %s330, 64, 64, 4
        $region52: #{tpu_custom_call.1} parent=47 // pred_fallthru
          _
      $region48: #{tpu_custom_call.1} parent=5 // pred_fallthru
        _
      %p347 = scmp.le.s32.totalorder 1, %s23
      %p348 = scmp.lt.s32.totalorder %s23, 3
      %p349 = pnand %p347, %p348
      %p350 = pneg %p349
      // Predicated region
      $region53: #{tpu_custom_call.1} parent=5 // pred_check
        _
      $region54: #{tpu_custom_call.1} parent=5 // pred_check_branch
        %352 = sbr.rel (%p349) target = $region56
      $region55: #{tpu_custom_call.1} parent=5 // pred_region
        %s353 = ssub.s32 %s23, 1
        %s354 = sand.u32 %s36, 1
        %s355 = scalar_lea.sflag [#allocation3], %s354
        %s356 = sand.u32 %s36, 1
        %s357 = smul.addr %s356, 16
        %s358 = scalar_lea.vmem [#allocation2], %s357
        // Predicated region
        $region57: #{tpu_custom_call.1} parent=55 // pred_check
          %p359 = pneg %p49
        $region58: #{tpu_custom_call.1} parent=55 // pred_check_branch
          %361 = sbr.rel (%p359) target = $region60
        $region59: #{tpu_custom_call.1} parent=55 // pred_region
          %362 = dma.done %s355, 256
        $region60: #{tpu_custom_call.1} parent=55 // pred_fallthru
          _
        // Predicated region
        $region61: #{tpu_custom_call.1} parent=55 // pred_check
          %p363 = pneg %p70
        $region62: #{tpu_custom_call.1} parent=55 // pred_check_branch
          %365 = sbr.rel (%p363) target = $region64
        $region63: #{tpu_custom_call.1} parent=55 // pred_region
          %366 = dma.done [#allocation6], 1024
        $region64: #{tpu_custom_call.1} parent=55 // pred_fallthru
          _
        // Predicated region
        $region65: #{tpu_custom_call.1} parent=55 // pred_check
          %p367 = pneg %p112
        $region66: #{tpu_custom_call.1} parent=55 // pred_check_branch
          %369 = sbr.rel (%p367) target = $region68
        $region67: #{tpu_custom_call.1} parent=55 // pred_region
          %370 = dma.done [#allocation6], 1024
        $region68: #{tpu_custom_call.1} parent=55 // pred_fallthru
          _
        // Predicated region
        $region69: #{tpu_custom_call.1} parent=55 // pred_check
          %p371 = pneg %p154
        $region70: #{tpu_custom_call.1} parent=55 // pred_check_branch
          %373 = sbr.rel (%p371) target = $region72
        $region71: #{tpu_custom_call.1} parent=55 // pred_region
          %374 = dma.done [#allocation9], 1024
        $region72: #{tpu_custom_call.1} parent=55 // pred_fallthru
          _
        // Predicated region
        $region73: #{tpu_custom_call.1} parent=55 // pred_check
          %p375 = pneg %p196
        $region74: #{tpu_custom_call.1} parent=55 // pred_check_branch
          %377 = sbr.rel (%p375) target = $region76
        $region75: #{tpu_custom_call.1} parent=55 // pred_region
          %378 = dma.done [#allocation9], 1024
        $region76: #{tpu_custom_call.1} parent=55 // pred_fallthru
          _
        %s379 = sand.u32 %s36, 1
        %s380 = scalar_lea.sflag [#allocation3], %s379
        %s381 = sand.u32 %s36, 1
        %s382 = smul.addr %s381, 16
        %s383 = scalar_lea.vmem [#allocation2], %s382
        %p384 = pneg %p49
        %p385 = pneg %p46
        %p386 = pneg %p70
        %p387 = pneg %p67
        %p388 = pneg %p91
        %p389 = pneg %p88
        %p390 = pneg %p112
        %p391 = pneg %p109
        %p392 = pneg %p133
        %p393 = pneg %p130
        %p394 = pneg %p154
        %p395 = pneg %p151
        %p396 = pneg %p175
        %p397 = pneg %p172
        %p398 = pneg %p196
        %p399 = pneg %p193
        %p400 = pneg %p217
        %p401 = pneg %p214
        %p402 = pneg %p243
        %p403 = pneg %p240
        %s404 = sand.u32 %s230, 1
        %s405 = scalar_lea.sflag [#allocation4], %s404
        %s406 = sand.u32 %s230, 1
        %s407 = smul.addr %s406, 32
        %s408 = scalar_lea.vmem [#allocation11], %s407
        %s409 = smul.u32 4, %s28
        %s410 = smul.u32 4, %s28
        %v412 = vld [vmem:[%s358] sm:$0xf]
        %v413 = vld [vmem:[%s358 + $0x4] sm:$0xf]
        %v414 = vld [vmem:[%s358 + $0x8] sm:$0xf]
        %v415 = vld [vmem:[%s358 + $0xc] sm:$0xf]
        %v416 = vld [vmem:[#allocation5] sm:$0xf]
        %v417 = vld [vmem:[#allocation5 + $0x4] sm:$0xf]
        %v418 = vld [vmem:[#allocation5 + $0x8] sm:$0xf]
        %v419 = vld [vmem:[#allocation5 + $0xc] sm:$0xf]
        %v420 = vld [vmem:[#allocation5 + $0x10] sm:$0xf]
        %v421 = vld [vmem:[#allocation5 + $0x14] sm:$0xf]
        %v422 = vld [vmem:[#allocation5 + $0x18] sm:$0xf]
        %v423 = vld [vmem:[#allocation5 + $0x1c] sm:$0xf]
        %v424 = vld [vmem:[#allocation5 + $0x20] sm:$0xf]
        %v425 = vld [vmem:[#allocation5 + $0x24] sm:$0xf]
        %v426 = vld [vmem:[#allocation5 + $0x28] sm:$0xf]
        %v427 = vld [vmem:[#allocation5 + $0x2c] sm:$0xf]
        %v428 = vld [vmem:[#allocation5 + $0x30] sm:$0xf]
        %v429 = vld [vmem:[#allocation5 + $0x34] sm:$0xf]
        %v430 = vld [vmem:[#allocation5 + $0x38] sm:$0xf]
        %v431 = vld [vmem:[#allocation5 + $0x3c] sm:$0xf]
        %v432 = vld [vmem:[%s2] sm:$0x1]
        %v434 = vlaneseq
        %v435 = vshrl.u32 %v434, 7
        %v436 = vsub.s32 0, %v435
        %v437 = vrot.slane %v432, %v436
        %v443 = vunpack.c.l.b16 %v412
        %v444 = vunpack.c.l.b16 %v413
        %v445 = vunpack.c.l.b16 %v414
        %v446 = vunpack.c.l.b16 %v415
        %v447 = vpack.c.b16 %v444, %v443
        %v448 = vpack.c.b16 %v446, %v445
        %v467 = vunpack.c.l.b16 %v416
        %v468 = vunpack.c.l.b16 %v417
        %v469 = vunpack.c.l.b16 %v418
        %v470 = vunpack.c.l.b16 %v419
        %v471 = vunpack.c.l.b16 %v420
        %v472 = vunpack.c.l.b16 %v421
        %v473 = vunpack.c.l.b16 %v422
        %v474 = vunpack.c.l.b16 %v423
        %v475 = vunpack.c.l.b16 %v424
        %v476 = vunpack.c.l.b16 %v425
        %v477 = vunpack.c.l.b16 %v426
        %v478 = vunpack.c.l.b16 %v427
        %v479 = vunpack.c.l.b16 %v428
        %v480 = vunpack.c.l.b16 %v429
        %v481 = vunpack.c.l.b16 %v430
        %v482 = vunpack.c.l.b16 %v431
        %v483 = vpack.c.b16 %v468, %v467
        %v484 = vpack.c.b16 %v470, %v469
        %v485 = vpack.c.b16 %v472, %v471
        %v486 = vpack.c.b16 %v474, %v473
        %v487 = vpack.c.b16 %v476, %v475
        %v488 = vpack.c.b16 %v478, %v477
        %v489 = vpack.c.b16 %v480, %v479
        %v490 = vpack.c.b16 %v482, %v481
        %499 = vmatprep.subr.bf16.mxu0 0
        %500 = vmatpush1.bf16.msra.mxu0 %v490
        %501 = vmatprep.subr.bf16.mxu0 0
        %502 = vmatpush1.bf16.msra.mxu0 %v489
        %503 = vmatprep.subr.bf16.mxu0 0
        %504 = vmatpush1.bf16.msra.mxu0 %v488
        %505 = vmatprep.subr.bf16.mxu0 0
        %506 = vmatpush1.bf16.msra.mxu0 %v487
        %507 = vmatprep.subr.bf16.mxu0 0
        %508 = vmatpush1.bf16.msra.mxu0 %v486
        %509 = vmatprep.subr.bf16.mxu0 0
        %510 = vmatpush1.bf16.msra.mxu0 %v485
        %511 = vmatprep.subr.bf16.mxu0 0
        %512 = vmatpush1.bf16.msra.mxu0 %v484
        %513 = vmatprep.subr.bf16.mxu0 0
        %514 = vmatpush1.bf16.msra.mxu0 %v483
        %515 = vmatprep.subr.bf16.mxu0 0
        %516 = vmatpush2.bf16.msra.mxu0 0
        %517 = vmatprep.subr.bf16.mxu0 0
        %518 = vmatpush2.bf16.msra.mxu0 0
        %519 = vmatprep.subr.bf16.mxu0 0
        %520 = vmatpush2.bf16.msra.mxu0 0
        %521 = vmatprep.subr.bf16.mxu0 0
        %522 = vmatpush2.bf16.msra.mxu0 0
        %523 = vmatprep.subr.bf16.mxu0 0
        %524 = vmatpush2.bf16.msra.mxu0 0
        %525 = vmatprep.subr.bf16.mxu0 0
        %526 = vmatpush2.bf16.msra.mxu0 0
        %527 = vmatprep.subr.bf16.mxu0 0
        %528 = vmatpush2.bf16.msra.mxu0 0
        %529 = vmatprep.subr.bf16.mxu0 0
        %530 = vmatpush2.bf16.msra.mxu0 0
        %531 = vmatprep.mubr.bf16.mxu0 0
        %532 = vmatmul.mubr.bf16.gmra.mxu0 %v447
        %v533 = vpop.f32.mrf.mxu0
        %v534 = vadd.f32 %v437, %v533
        %v535 = vpop.f32.mrf.mxu0
        %v536 = vpop.f32.mrf.mxu0
        %v537 = vadd.f32 %v437, %v536
        %v538 = vpop.f32.mrf.mxu0
        %539 = vmatprep.mubr.bf16.mxu0 0
        %540 = vmatmul.mubr.bf16.gmra.mxu0 %v448
        %v541 = vpop.f32.mrf.mxu0
        %v542 = vadd.f32 %v437, %v541
        %v543 = vpop.f32.mrf.mxu0
        %v544 = vpop.f32.mrf.mxu0
        %v545 = vadd.f32 %v437, %v544
        %v546 = vpop.f32.mrf.mxu0
        %547 = vdwg.mxu0
        %v548 = vmax.f32 %v534, 0.0
        %v549 = vmax.f32 %v537, 0.0
        %v550 = vmax.f32 %v542, 0.0
        %v551 = vmax.f32 %v545, 0.0
        %v552 = vpack.c.bf16 %v549, %v548
        %v553 = vpack.c.bf16 %v551, %v550
        %v554 = vld [vmem:[#allocation7] sm:$0xf]
        %v555 = vld [vmem:[#allocation7 + $0x4] sm:$0xf]
        %v556 = vld [vmem:[#allocation7 + $0x8] sm:$0xf]
        %v557 = vld [vmem:[#allocation7 + $0xc] sm:$0xf]
        %v558 = vld [vmem:[#allocation7 + $0x10] sm:$0xf]
        %v559 = vld [vmem:[#allocation7 + $0x14] sm:$0xf]
        %v560 = vld [vmem:[#allocation7 + $0x18] sm:$0xf]
        %v561 = vld [vmem:[#allocation7 + $0x1c] sm:$0xf]
        %v562 = vld [vmem:[#allocation7 + $0x20] sm:$0xf]
        %v563 = vld [vmem:[#allocation7 + $0x24] sm:$0xf]
        %v564 = vld [vmem:[#allocation7 + $0x28] sm:$0xf]
        %v565 = vld [vmem:[#allocation7 + $0x2c] sm:$0xf]
        %v566 = vld [vmem:[#allocation7 + $0x30] sm:$0xf]
        %v567 = vld [vmem:[#allocation7 + $0x34] sm:$0xf]
        %v568 = vld [vmem:[#allocation7 + $0x38] sm:$0xf]
        %v569 = vld [vmem:[#allocation7 + $0x3c] sm:$0xf]
        %v570 = vld [vmem:[%s4] sm:$0x1]
        %v572 = vlaneseq
        %v573 = vshrl.u32 %v572, 7
        %v574 = vsub.s32 0, %v573
        %v575 = vrot.slane %v570, %v574
        %v593 = vunpack.c.l.b16 %v554
        %v594 = vunpack.c.l.b16 %v555
        %v595 = vunpack.c.l.b16 %v556
        %v596 = vunpack.c.l.b16 %v557
        %v597 = vunpack.c.l.b16 %v558
        %v598 = vunpack.c.l.b16 %v559
        %v599 = vunpack.c.l.b16 %v560
        %v600 = vunpack.c.l.b16 %v561
        %v601 = vunpack.c.l.b16 %v562
        %v602 = vunpack.c.l.b16 %v563
        %v603 = vunpack.c.l.b16 %v564
        %v604 = vunpack.c.l.b16 %v565
        %v605 = vunpack.c.l.b16 %v566
        %v606 = vunpack.c.l.b16 %v567
        %v607 = vunpack.c.l.b16 %v568
        %v608 = vunpack.c.l.b16 %v569
        %v609 = vpack.c.b16 %v594, %v593
        %v610 = vpack.c.b16 %v596, %v595
        %v611 = vpack.c.b16 %v598, %v597
        %v612 = vpack.c.b16 %v600, %v599
        %v613 = vpack.c.b16 %v602, %v601
        %v614 = vpack.c.b16 %v604, %v603
        %v615 = vpack.c.b16 %v606, %v605
        %v616 = vpack.c.b16 %v608, %v607
        %625 = vmatprep.subr.bf16.mxu0 0
        %626 = vmatpush1.bf16.msra.mxu0 %v616
        %627 = vmatprep.subr.bf16.mxu0 0
        %628 = vmatpush1.bf16.msra.mxu0 %v615
        %629 = vmatprep.subr.bf16.mxu0 0
        %630 = vmatpush1.bf16.msra.mxu0 %v614
        %631 = vmatprep.subr.bf16.mxu0 0
        %632 = vmatpush1.bf16.msra.mxu0 %v613
        %633 = vmatprep.subr.bf16.mxu0 0
        %634 = vmatpush1.bf16.msra.mxu0 %v612
        %635 = vmatprep.subr.bf16.mxu0 0
        %636 = vmatpush1.bf16.msra.mxu0 %v611
        %637 = vmatprep.subr.bf16.mxu0 0
        %638 = vmatpush1.bf16.msra.mxu0 %v610
        %639 = vmatprep.subr.bf16.mxu0 0
        %640 = vmatpush1.bf16.msra.mxu0 %v609
        %641 = vmatprep.subr.bf16.mxu0 0
        %642 = vmatpush2.bf16.msra.mxu0 0
        %643 = vmatprep.subr.bf16.mxu0 0
        %644 = vmatpush2.bf16.msra.mxu0 0
        %645 = vmatprep.subr.bf16.mxu0 0
        %646 = vmatpush2.bf16.msra.mxu0 0
        %647 = vmatprep.subr.bf16.mxu0 0
        %648 = vmatpush2.bf16.msra.mxu0 0
        %649 = vmatprep.subr.bf16.mxu0 0
        %650 = vmatpush2.bf16.msra.mxu0 0
        %651 = vmatprep.subr.bf16.mxu0 0
        %652 = vmatpush2.bf16.msra.mxu0 0
        %653 = vmatprep.subr.bf16.mxu0 0
        %654 = vmatpush2.bf16.msra.mxu0 0
        %655 = vmatprep.subr.bf16.mxu0 0
        %656 = vmatpush2.bf16.msra.mxu0 0
        %657 = vmatprep.mubr.bf16.mxu0 0
        %658 = vmatmul.mubr.bf16.gmra.mxu0 %v552
        %v659 = vpop.f32.mrf.mxu0
        %v660 = vadd.f32 %v575, %v659
        %v661 = vpop.f32.mrf.mxu0
        %v662 = vpop.f32.mrf.mxu0
        %v663 = vadd.f32 %v575, %v662
        %v664 = vpop.f32.mrf.mxu0
        %665 = vmatprep.mubr.bf16.mxu0 0
        %666 = vmatmul.mubr.bf16.gmra.mxu0 %v553
        %v667 = vpop.f32.mrf.mxu0
        %v668 = vadd.f32 %v575, %v667
        %v669 = vpop.f32.mrf.mxu0
        %v670 = vpop.f32.mrf.mxu0
        %v671 = vadd.f32 %v575, %v670
        %v672 = vpop.f32.mrf.mxu0
        %673 = vdwg.mxu0
        %v674 = vmax.f32 %v660, 0.0
        %v675 = vmax.f32 %v663, 0.0
        %v676 = vmax.f32 %v668, 0.0
        %v677 = vmax.f32 %v671, 0.0
        %v678 = vpack.c.bf16 %v675, %v674
        %v679 = vpack.c.bf16 %v677, %v676
        %v680 = vld [vmem:[#allocation8] sm:$0xf]
        %v681 = vld [vmem:[#allocation8 + $0x4] sm:$0xf]
        %v682 = vld [vmem:[#allocation8 + $0x8] sm:$0xf]
        %v683 = vld [vmem:[#allocation8 + $0xc] sm:$0xf]
        %v684 = vld [vmem:[#allocation8 + $0x10] sm:$0xf]
        %v685 = vld [vmem:[#allocation8 + $0x14] sm:$0xf]
        %v686 = vld [vmem:[#allocation8 + $0x18] sm:$0xf]
        %v687 = vld [vmem:[#allocation8 + $0x1c] sm:$0xf]
        %v688 = vld [vmem:[#allocation8 + $0x20] sm:$0xf]
        %v689 = vld [vmem:[#allocation8 + $0x24] sm:$0xf]
        %v690 = vld [vmem:[#allocation8 + $0x28] sm:$0xf]
        %v691 = vld [vmem:[#allocation8 + $0x2c] sm:$0xf]
        %v692 = vld [vmem:[#allocation8 + $0x30] sm:$0xf]
        %v693 = vld [vmem:[#allocation8 + $0x34] sm:$0xf]
        %v694 = vld [vmem:[#allocation8 + $0x38] sm:$0xf]
        %v695 = vld [vmem:[#allocation8 + $0x3c] sm:$0xf]
        %v696 = vld [vmem:[%s6] sm:$0x1]
        %v698 = vlaneseq
        %v699 = vshrl.u32 %v698, 7
        %v700 = vsub.s32 0, %v699
        %v701 = vrot.slane %v696, %v700
        %v719 = vunpack.c.l.b16 %v680
        %v720 = vunpack.c.l.b16 %v681
        %v721 = vunpack.c.l.b16 %v682
        %v722 = vunpack.c.l.b16 %v683
        %v723 = vunpack.c.l.b16 %v684
        %v724 = vunpack.c.l.b16 %v685
        %v725 = vunpack.c.l.b16 %v686
        %v726 = vunpack.c.l.b16 %v687
        %v727 = vunpack.c.l.b16 %v688
        %v728 = vunpack.c.l.b16 %v689
        %v729 = vunpack.c.l.b16 %v690
        %v730 = vunpack.c.l.b16 %v691
        %v731 = vunpack.c.l.b16 %v692
        %v732 = vunpack.c.l.b16 %v693
        %v733 = vunpack.c.l.b16 %v694
        %v734 = vunpack.c.l.b16 %v695
        %v735 = vpack.c.b16 %v720, %v719
        %v736 = vpack.c.b16 %v722, %v721
        %v737 = vpack.c.b16 %v724, %v723
        %v738 = vpack.c.b16 %v726, %v725
        %v739 = vpack.c.b16 %v728, %v727
        %v740 = vpack.c.b16 %v730, %v729
        %v741 = vpack.c.b16 %v732, %v731
        %v742 = vpack.c.b16 %v734, %v733
        %751 = vmatprep.subr.bf16.mxu0 0
        %752 = vmatpush1.bf16.msra.mxu0 %v742
        %753 = vmatprep.subr.bf16.mxu0 0
        %754 = vmatpush1.bf16.msra.mxu0 %v741
        %755 = vmatprep.subr.bf16.mxu0 0
        %756 = vmatpush1.bf16.msra.mxu0 %v740
        %757 = vmatprep.subr.bf16.mxu0 0
        %758 = vmatpush1.bf16.msra.mxu0 %v739
        %759 = vmatprep.subr.bf16.mxu0 0
        %760 = vmatpush1.bf16.msra.mxu0 %v738
        %761 = vmatprep.subr.bf16.mxu0 0
        %762 = vmatpush1.bf16.msra.mxu0 %v737
        %763 = vmatprep.subr.bf16.mxu0 0
        %764 = vmatpush1.bf16.msra.mxu0 %v736
        %765 = vmatprep.subr.bf16.mxu0 0
        %766 = vmatpush1.bf16.msra.mxu0 %v735
        %767 = vmatprep.subr.bf16.mxu0 0
        %768 = vmatpush2.bf16.msra.mxu0 0
        %769 = vmatprep.subr.bf16.mxu0 0
        %770 = vmatpush2.bf16.msra.mxu0 0
        %771 = vmatprep.subr.bf16.mxu0 0
        %772 = vmatpush2.bf16.msra.mxu0 0
        %773 = vmatprep.subr.bf16.mxu0 0
        %774 = vmatpush2.bf16.msra.mxu0 0
        %775 = vmatprep.subr.bf16.mxu0 0
        %776 = vmatpush2.bf16.msra.mxu0 0
        %777 = vmatprep.subr.bf16.mxu0 0
        %778 = vmatpush2.bf16.msra.mxu0 0
        %779 = vmatprep.subr.bf16.mxu0 0
        %780 = vmatpush2.bf16.msra.mxu0 0
        %781 = vmatprep.subr.bf16.mxu0 0
        %782 = vmatpush2.bf16.msra.mxu0 0
        %783 = vmatprep.mubr.bf16.mxu0 0
        %784 = vmatmul.mubr.bf16.gmra.mxu0 %v678
        %v785 = vpop.f32.mrf.mxu0
        %v786 = vadd.f32 %v701, %v785
        %v787 = vpop.f32.mrf.mxu0
        %v788 = vpop.f32.mrf.mxu0
        %v789 = vadd.f32 %v701, %v788
        %v790 = vpop.f32.mrf.mxu0
        %791 = vmatprep.mubr.bf16.mxu0 0
        %792 = vmatmul.mubr.bf16.gmra.mxu0 %v679
        %v793 = vpop.f32.mrf.mxu0
        %v794 = vadd.f32 %v701, %v793
        %v795 = vpop.f32.mrf.mxu0
        %v796 = vpop.f32.mrf.mxu0
        %v797 = vadd.f32 %v701, %v796
        %v798 = vpop.f32.mrf.mxu0
        %799 = vdwg.mxu0
        %v800 = vmax.f32 %v786, 0.0
        %v801 = vmax.f32 %v789, 0.0
        %v802 = vmax.f32 %v794, 0.0
        %v803 = vmax.f32 %v797, 0.0
        %v804 = vpack.c.bf16 %v801, %v800
        %v805 = vpack.c.bf16 %v803, %v802
        %v806 = vld [vmem:[#allocation10] sm:$0xf]
        %v807 = vld [vmem:[#allocation10 + $0x4] sm:$0xf]
        %v808 = vld [vmem:[#allocation10 + $0x8] sm:$0xf]
        %v809 = vld [vmem:[#allocation10 + $0xc] sm:$0xf]
        %v810 = vld [vmem:[#allocation10 + $0x10] sm:$0xf]
        %v811 = vld [vmem:[#allocation10 + $0x14] sm:$0xf]
        %v812 = vld [vmem:[#allocation10 + $0x18] sm:$0xf]
        %v813 = vld [vmem:[#allocation10 + $0x1c] sm:$0xf]
        %v814 = vld [vmem:[#allocation10 + $0x20] sm:$0xf]
        %v815 = vld [vmem:[#allocation10 + $0x24] sm:$0xf]
        %v816 = vld [vmem:[#allocation10 + $0x28] sm:$0xf]
        %v817 = vld [vmem:[#allocation10 + $0x2c] sm:$0xf]
        %v818 = vld [vmem:[#allocation10 + $0x30] sm:$0xf]
        %v819 = vld [vmem:[#allocation10 + $0x34] sm:$0xf]
        %v820 = vld [vmem:[#allocation10 + $0x38] sm:$0xf]
        %v821 = vld [vmem:[#allocation10 + $0x3c] sm:$0xf]
        %v822 = vld [vmem:[%s8] sm:$0x1]
        %v824 = vlaneseq
        %v825 = vshrl.u32 %v824, 7
        %v826 = vsub.s32 0, %v825
        %v827 = vrot.slane %v822, %v826
        %v845 = vunpack.c.l.b16 %v806
        %v846 = vunpack.c.l.b16 %v807
        %v847 = vunpack.c.l.b16 %v808
        %v848 = vunpack.c.l.b16 %v809
        %v849 = vunpack.c.l.b16 %v810
        %v850 = vunpack.c.l.b16 %v811
        %v851 = vunpack.c.l.b16 %v812
        %v852 = vunpack.c.l.b16 %v813
        %v853 = vunpack.c.l.b16 %v814
        %v854 = vunpack.c.l.b16 %v815
        %v855 = vunpack.c.l.b16 %v816
        %v856 = vunpack.c.l.b16 %v817
        %v857 = vunpack.c.l.b16 %v818
        %v858 = vunpack.c.l.b16 %v819
        %v859 = vunpack.c.l.b16 %v820
        %v860 = vunpack.c.l.b16 %v821
        %v861 = vpack.c.b16 %v846, %v845
        %v862 = vpack.c.b16 %v848, %v847
        %v863 = vpack.c.b16 %v850, %v849
        %v864 = vpack.c.b16 %v852, %v851
        %v865 = vpack.c.b16 %v854, %v853
        %v866 = vpack.c.b16 %v856, %v855
        %v867 = vpack.c.b16 %v858, %v857
        %v868 = vpack.c.b16 %v860, %v859
        %877 = vmatprep.subr.bf16.mxu0 0
        %878 = vmatpush1.bf16.msra.mxu0 %v868
        %879 = vmatprep.subr.bf16.mxu0 0
        %880 = vmatpush1.bf16.msra.mxu0 %v867
        %881 = vmatprep.subr.bf16.mxu0 0
        %882 = vmatpush1.bf16.msra.mxu0 %v866
        %883 = vmatprep.subr.bf16.mxu0 0
        %884 = vmatpush1.bf16.msra.mxu0 %v865
        %885 = vmatprep.subr.bf16.mxu0 0
        %886 = vmatpush1.bf16.msra.mxu0 %v864
        %887 = vmatprep.subr.bf16.mxu0 0
        %888 = vmatpush1.bf16.msra.mxu0 %v863
        %889 = vmatprep.subr.bf16.mxu0 0
        %890 = vmatpush1.bf16.msra.mxu0 %v862
        %891 = vmatprep.subr.bf16.mxu0 0
        %892 = vmatpush1.bf16.msra.mxu0 %v861
        %893 = vmatprep.subr.bf16.mxu0 0
        %894 = vmatpush2.bf16.msra.mxu0 0
        %895 = vmatprep.subr.bf16.mxu0 0
        %896 = vmatpush2.bf16.msra.mxu0 0
        %897 = vmatprep.subr.bf16.mxu0 0
        %898 = vmatpush2.bf16.msra.mxu0 0
        %899 = vmatprep.subr.bf16.mxu0 0
        %900 = vmatpush2.bf16.msra.mxu0 0
        %901 = vmatprep.subr.bf16.mxu0 0
        %902 = vmatpush2.bf16.msra.mxu0 0
        %903 = vmatprep.subr.bf16.mxu0 0
        %904 = vmatpush2.bf16.msra.mxu0 0
        %905 = vmatprep.subr.bf16.mxu0 0
        %906 = vmatpush2.bf16.msra.mxu0 0
        %907 = vmatprep.subr.bf16.mxu0 0
        %908 = vmatpush2.bf16.msra.mxu0 0
        %909 = vmatprep.mubr.bf16.mxu0 0
        %910 = vmatmul.mubr.bf16.gmra.mxu0 %v804
        %v911 = vpop.f32.mrf.mxu0
        %v912 = vadd.f32 %v827, %v911
        %v913 = vpop.f32.mrf.mxu0
        %v914 = vpop.f32.mrf.mxu0
        %v915 = vadd.f32 %v827, %v914
        %v916 = vpop.f32.mrf.mxu0
        %917 = vmatprep.mubr.bf16.mxu0 0
        %918 = vmatmul.mubr.bf16.gmra.mxu0 %v805
        %v919 = vpop.f32.mrf.mxu0
        %v920 = vadd.f32 %v827, %v919
        %v921 = vpop.f32.mrf.mxu0
        %v922 = vpop.f32.mrf.mxu0
        %v923 = vadd.f32 %v827, %v922
        %v924 = vpop.f32.mrf.mxu0
        %925 = vdwg.mxu0
        %926 = vst [vmem:[%s408] sm:$0xff] %v912
        %927 = vst [vmem:[%s408 + $0x8] sm:$0xff] %v915
        %928 = vst [vmem:[%s408 + $0x10] sm:$0xff] %v920
        %929 = vst [vmem:[%s408 + $0x18] sm:$0xff] %v923
        %s930 = sand.u32 %s230, 1
        %s931 = scalar_lea.sflag [#allocation4], %s930
        %s932 = sand.u32 %s230, 1
        %s933 = smul.addr %s932, 32
        %s934 = scalar_lea.vmem [#allocation11], %s933
        // Predicated region
        $region77: #{tpu_custom_call.1} parent=55 // pred_check
          %p935 = pneg %p240
        $region78: #{tpu_custom_call.1} parent=55 // pred_check_branch
          %937 = sbr.rel (%p935) target = $region80
        $region79: #{tpu_custom_call.1} parent=55 // pred_region
          %s938 = smul.u32 4, %s28
          %s940 = ssub.s32 512, 512
          %941 = vsyncadd %s931, %s940
          %s942 = smul.addr %s938, 128
          %s943 = scalar_lea.hbm %s9, %s942
          %s944 = sshll.u32 %s934, 4
          %s945 = int_to_ptr.vmem [resolvable:$true] %s944
          %950 = dma.vmem_to_hbm [thread:$0]  %s945, 512, %s943, %s931, 128, 128, 8
        $region80: #{tpu_custom_call.1} parent=55 // pred_fallthru
          _
      $region56: #{tpu_custom_call.1} parent=5 // pred_fallthru
        _
      %p951 = scmp.le.s32.totalorder 2, %s23
      // Predicated region
      $region81: #{tpu_custom_call.1} parent=5 // pred_check
        %p952 = pneg %p951
      $region82: #{tpu_custom_call.1} parent=5 // pred_check_branch
        %954 = sbr.rel (%p952) target = $region84
      $region83: #{tpu_custom_call.1} parent=5 // pred_region
        %s955 = ssub.s32 %s23, 2
        // Predicated region
        $region85: #{tpu_custom_call.1} parent=83 // pred_check
          %p956 = pneg %p246
        $region86: #{tpu_custom_call.1} parent=83 // pred_check_branch
          %958 = sbr.rel (%p956) target = $region88
        $region87: #{tpu_custom_call.1} parent=83 // pred_region
          %s959 = sand.u32 %s231, 1
          %s960 = scalar_lea.sflag [#allocation4], %s959
          %s961 = sand.u32 %s231, 1
          %s962 = smul.addr %s961, 32
          %s963 = scalar_lea.vmem [#allocation11], %s962
          %964 = dma.done %s960, 512
        $region88: #{tpu_custom_call.1} parent=83 // pred_fallthru
          _
      $region84: #{tpu_custom_call.1} parent=5 // pred_fallthru
        _
    $region6: #{tpu_custom_call.1} parent=1 // loop_footer
      %s27 = sadd.s32 1, %s23
    $region7: #{tpu_custom_call.1} parent=1 // loop_footer_branch
      %22 = sbr.rel target = $region3
    $region8: #{tpu_custom_call.1} parent=1 // loop_exit
      _
    %965 = vsyncpa [#allocation3], 1
    %s966 = scalar_lea.sflag [#allocation3], 1
    %967 = vsyncpa %s966, 1
    %968 = vsyncpa [#allocation6], 1
    %969 = vsyncpa [#allocation9], 1
    %970 = vsyncpa [#allocation4], 1
    %s971 = scalar_lea.sflag [#allocation4], 1
    %972 = vsyncpa %s971, 1

</llo_original>
